<compile_context>
chip_gen: v5e
topology: v5e:2x2
jax: 0.10.0
libtpu: 0.0.40
codegen_flags: <defaults>
</compile_context>

<pallas_src>
import jax
import jax.numpy as jnp
from jax import lax
from jax.experimental import pallas as pl
from jax.experimental.pallas import tpu as pltpu

EPS = 1e-6


def _round_up(v, m):
    return -(-v // m) * m


def _vmem_capacity_bytes():
    try:
        return int(pltpu.get_tpu_info().vmem_capacity_bytes)
    except Exception:
        return 64 << 20            # conservative default (v7x per-TC size)


# ----------------------------- kernel bodies --------------------------------
def _make_fused_kernel(has_bias, apply_silu, inv_count):
    """Single-pass AdaGN: stats + modulation (+bias, +SiLU) on one (1,Gb,R,L) tile."""

    def kernel(*refs):
        if has_bias:
            x_ref, gamma_ref, beta_ref, bias_ref, o_ref = refs
        else:
            x_ref, gamma_ref, beta_ref, o_ref = refs

        x = x_ref[...].astype(jnp.float32)                       # (1, Gb, R, L)
        if has_bias:
            x = x + bias_ref[...].astype(jnp.float32)            # fused temb bias

        # Single-pass per-group stats (biased variance, clamp guards cancellation).
        s1 = jnp.sum(jnp.sum(x, axis=3, keepdims=True), axis=2, keepdims=True)
        s2 = jnp.sum(jnp.sum(x * x, axis=3, keepdims=True), axis=2, keepdims=True)
        mean = s1 * inv_count
        var = jnp.maximum(s2 * inv_count - mean * mean, 0.0)
        inv = lax.rsqrt(var + EPS)

        scale = gamma_ref[...].astype(jnp.float32) * inv          # (1, Gb, R, 1)
        shift = beta_ref[...].astype(jnp.float32) - mean * scale
        t = x * scale + shift                                     # 2 VPU ops / element
        if apply_silu:
            t = t * jax.nn.sigmoid(t)                             # fused SiLU (EUP slot)
        o_ref[...] = t.astype(o_ref.dtype)

    return kernel


def _make_stats_kernel(has_bias, inv_count):
    """Pass 1 of the S-chunked path: accumulate per-(n,g) mean / inv-std."""

    def kernel(*refs):
        if has_bias:
            x_ref, bias_ref, mean_ref, inv_ref, s1_ref, s2_ref = refs
        else:
            x_ref, mean_ref, inv_ref, s1_ref, s2_ref = refs
        s = pl.program_id(2)

        @pl.when(s == 0)
        def _():
            s1_ref[...] = jnp.zeros_like(s1_ref)
            s2_ref[...] = jnp.zeros_like(s2_ref)

        x = x_ref[...].astype(jnp.float32)                        # (1, 1, R, Lc)
        if has_bias:
            x = x + bias_ref[...].astype(jnp.float32)
        s1_ref[...] += jnp.sum(jnp.sum(x, axis=3, keepdims=True), axis=2, keepdims=True)
        s2_ref[...] += jnp.sum(jnp.sum(x * x, axis=3, keepdims=True), axis=2, keepdims=True)

        @pl.when(s == pl.num_programs(2) - 1)
        def _():
            mean = s1_ref[...] * inv_count
            var = jnp.maximum(s2_ref[...] * inv_count - mean * mean, 0.0)
            mean_ref[...] = mean
            inv_ref[...] = lax.rsqrt(var + EPS)

    return kernel


def _make_apply_kernel(has_bias, apply_silu):
    """Pass 2 of the S-chunked path: modulate one (1,1,R,Lc) chunk."""

    def kernel(*refs):
        if has_bias:
            x_ref, gamma_ref, beta_ref, mean_ref, inv_ref, bias_ref, o_ref = refs
        else:
            x_ref, gamma_ref, beta_ref, mean_ref, inv_ref, o_ref = refs

        x = x_ref[...].astype(jnp.float32)                        # (1, 1, R, Lc)
        if has_bias:
            x = x + bias_ref[...].astype(jnp.float32)
        scale = gamma_ref[...].astype(jnp.float32) * inv_ref[...]
        shift = beta_ref[...].astype(jnp.float32) - mean_ref[...] * scale
        t = x * scale + shift
        if apply_silu:
            t = t * jax.nn.sigmoid(t)
        o_ref[...] = t.astype(o_ref.dtype)

    return kernel


# ----------------------------- wrapper ---------------------------------------
def adaptive_group_norm(x, style, style_w_t, style_b, num_groups, *,
                        bias=None, apply_silu=False, force_chunk_cols=None):
    """Fused AdaptiveGroupNorm (+ optional per-channel bias, + optional SiLU).

    x:         (N, C, D, H, W)
    style:     (N, style_dim)
    style_w_t: (style_dim, 2C) pre-transposed Linear weight; style_b: (2C,)
    bias:      optional (N, C) per-channel bias added BEFORE the GroupNorm
               (fuses the temb Dense broadcast-add of the BigGAN block).
    """
    N, C, D, H, W = x.shape
    G = num_groups
    Cg = C // G
    has_bias = bias is not None

    # Style modulation: trivially small GEMM -> leave to XLA.
    gb = style.astype(jnp.float32) @ style_w_t.astype(jnp.float32) + style_b
    gamma, beta = gb[:, :C], gb[:, C:]

    # Lane-dense packing: prefer (Cg*D, H*W) (denser sublanes), else (Cg, D*H*W).
    if (H * W) % 128 == 0:
        R, L, rep = Cg * D, H * W, D
    elif (D * H * W) % 128 == 0:
        R, L, rep = Cg, D * H * W, 1
    else:
        # TODO(synk): pad/repack the lane axis to a 128-multiple; masked stores here.
        R, L, rep = Cg * D, H * W, D

    x_r = x.reshape(N, G, R, L)

    def _rows(v):  # (N, C) -> (N, G, R, 1), repeated `rep` times along the sublane axis
        v = v.reshape(N, G, Cg, 1).astype(jnp.float32)
        return jnp.broadcast_to(v, (N, G, Cg, rep)).reshape(N, G, R, 1)

    gamma_rows = _rows(gamma)
    beta_rows = _rows(beta)
    bias_rows = _rows(bias) if has_bias else None

    # ---------------- VMEM budget (generation-aware) ----------------
    cap = _vmem_capacity_bytes()
    budget = int(0.70 * cap)
    itemsize = x.dtype.itemsize
    r_pad = _round_up(R, 8)
    l_pad = _round_up(L, 128)
    n_side = 3 if has_bias else 2
    grp_io = r_pad * l_pad * itemsize
    grp_f32 = r_pad * l_pad * 4
    grp_side = n_side * 2 * r_pad * 128 * 4       # per-step gamma/beta/bias blocks
    # 2x double-buffered in + out tiles, ~3 f32 temporaries, side inputs.
    per_group_total = 4 * grp_io + 3 * grp_f32 + grp_side
    slack = 2 << 20

    def _limit(need):
        return int(min(max(int(need * 1.25), 32 << 20), int(0.85 * cap)))

    # ---------------- path selection ----------------
    use_chunked = False
    Lc = L
    if force_chunk_cols is not None:
        Lc = int(force_chunk_cols)
        assert L % Lc == 0 and Lc % 128 == 0, "force_chunk_cols must divide L, %128==0"
        use_chunked = True
    elif per_group_total + slack > budget and L % 128 == 0:
        use_chunked = True
        per_col = r_pad * (4 * itemsize + 12)      # bytes per lane column (apply pass)
        lc_cap = max(((budget - grp_side - slack) // per_col) // 128 * 128, 128)
        Lc = 128
        for cand in range(lc_cap, 127, -128):
            if L % cand == 0:
                Lc = cand
                break

    if not use_chunked:
        # -------- single-pass fused kernel, Gb groups per grid step --------
        Gb = 1
        for d in [d for d in range(G, 0, -1) if G % d == 0]:
            if d * per_group_total + slack > budget:
                continue
            if N * (G // d) >= 2 or d == 1:        # keep >=2 steps for megacore (v7x)
                Gb = d
                break

        side_spec = pl.BlockSpec((1, Gb, R, 1), lambda n, g: (n, g, 0, 0))
        in_specs = [pl.BlockSpec((1, Gb, R, L), lambda n, g: (n, g, 0, 0)),
                    side_spec, side_spec]
        operands = [x_r, gamma_rows, beta_rows]
        if has_bias:
            in_specs.append(side_spec)
            operands.append(bias_rows)

        out = pl.pallas_call(
            _make_fused_kernel(has_bias, apply_silu, 1.0 / float(R * L)),
            out_shape=jax.ShapeDtypeStruct((N, G, R, L), x.dtype),
            grid_spec=pltpu.PrefetchScalarGridSpec(
                num_scalar_prefetch=0,
                grid=(N, G // Gb),
                in_specs=in_specs,
                out_specs=pl.BlockSpec((1, Gb, R, L), lambda n, g: (n, g, 0, 0)),
            ),
            compiler_params=pltpu.CompilerParams(
                dimension_semantics=("parallel", "parallel"),
                vmem_limit_bytes=_limit(Gb * per_group_total + slack),
            ),
        )(*operands)
        return out.reshape(N, C, D, H, W)

    # -------- S-chunked two-pass path (tiles too big for VMEM, e.g. v7x) --------
    S = L // Lc
    chunk_io = r_pad * Lc * itemsize
    chunk_f32 = r_pad * Lc * 4
    x_spec = pl.BlockSpec((1, 1, R, Lc), lambda n, g, s: (n, g, 0, s))
    side_spec = pl.BlockSpec((1, 1, R, 1), lambda n, g, s: (n, g, 0, 0))
    stat_spec = pl.BlockSpec((1, 1, 1, 1), lambda n, g, s: (n, g, 0, 0))

    stats_in_specs = [x_spec]
    stats_ops = [x_r]
    if has_bias:
        stats_in_specs.append(side_spec)
        stats_ops.append(bias_rows)

    mean, inv = pl.pallas_call(
        _make_stats_kernel(has_bias, 1.0 / float(R * L)),
        out_shape=(jax.ShapeDtypeStruct((N, G, 1, 1), jnp.float32),
                   jax.ShapeDtypeStruct((N, G, 1, 1), jnp.float32)),
        grid_spec=pltpu.PrefetchScalarGridSpec(
            num_scalar_prefetch=0,
            grid=(N, G, S),
            in_specs=stats_in_specs,
            out_specs=[stat_spec, stat_spec],
            scratch_shapes=[pltpu.VMEM((1, 1, 1, 1), jnp.float32),
                            pltpu.VMEM((1, 1, 1, 1), jnp.float32)],
        ),
        compiler_params=pltpu.CompilerParams(
            dimension_semantics=("parallel", "parallel", "arbitrary"),
            vmem_limit_bytes=_limit(2 * chunk_io + 2 * chunk_f32 + grp_side + slack),
        ),
    )(*stats_ops)

    apply_in_specs = [x_spec, side_spec, side_spec, stat_spec, stat_spec]
    apply_ops = [x_r, gamma_rows, beta_rows, mean, inv]
    if has_bias:
        apply_in_specs.append(side_spec)
        apply_ops.append(bias_rows)

    out = pl.pallas_call(
        _make_apply_kernel(has_bias, apply_silu),
        out_shape=jax.ShapeDtypeStruct((N, G, R, L), x.dtype),
        grid_spec=pltpu.PrefetchScalarGridSpec(
            num_scalar_prefetch=0,
            grid=(N, G, S),
            in_specs=apply_in_specs,
            out_specs=pl.BlockSpec((1, 1, R, Lc), lambda n, g, s: (n, g, 0, s)),
        ),
        compiler_params=pltpu.CompilerParams(
            dimension_semantics=("parallel", "parallel", "arbitrary"),
            vmem_limit_bytes=_limit(4 * chunk_io + 3 * chunk_f32 + grp_side + slack),
        ),
    )(*apply_ops)
    return out.reshape(N, C, D, H, W)


# ----------------------------- pure-JAX reference ----------------------------
def _silu(v):
    return v * jax.nn.sigmoid(v)


def reference_adagn(x, style, style_w_t, style_b, num_groups, *,
                    bias=None, apply_silu=False, force_chunk_cols=None):
    del force_chunk_cols
    N, C = x.shape[0], x.shape[1]
    gb = style.astype(jnp.float32) @ style_w_t.astype(jnp.float32) + style_b
    gamma = gb[:, :C].reshape(N, C, 1, 1, 1)
    beta = gb[:, C:].reshape(N, C, 1, 1, 1)
    xin = x.astype(jnp.float32)
    if bias is not None:
        xin = xin + bias.reshape(N, C, 1, 1, 1).astype(jnp.float32)
    xr = xin.reshape(N, num_groups, -1)
    mean = xr.mean(-1, keepdims=True)
    var = jnp.mean(jnp.square(xr - mean), -1, keepdims=True)
    xn = ((xr - mean) / jnp.sqrt(var + EPS)).reshape(xin.shape)
    out = gamma * xn + beta
    if apply_silu:
        out = _silu(out)
    return out.astype(x.dtype)


# ------------------- ResnetBlockBigGANpp_Adagn forward (glue) ----------------
def _conv3d(x, w, b, pad):
    # TODO(synk): 3x3x3 / 1x1x1 convolutions are left to XLA (no Pallas conv kernel).
    out = lax.conv_general_dilated(
        x, w, window_strides=(1, 1, 1), padding=pad,
        dimension_numbers=("NCDHW", "OIDHW", "NCDHW"))
    return out + b.reshape(1, -1, 1, 1, 1)


def resnet_block_adagn_forward(p, x, temb, zemb, adagn_fn):
    """ResnetBlockBigGANpp_Adagn.forward for up=down=False, skip_rescale=True, act=SiLU."""
    in_ch = x.shape[1]
    out_ch = p["conv0_w"].shape[0]
    g0 = min(in_ch // 4, 32)
    g1 = min(out_ch // 4, 32)

    # act(GroupNorm_0(x, zemb)) -- SiLU fused into the AdaGN kernel.
    h = adagn_fn(x, zemb, p["gn0_w_t"], p["gn0_b"], g0, apply_silu=True)
    # TODO(synk): up/down (FIR / naive 3D resampling) paths not implemented (up=down=False).
    h = _conv3d(h, p["conv0_w"], p["conv0_b"], [(1, 1)] * 3)
    # Dense_0(act(temb)) broadcast-add fused into the second AdaGN (bias=...).
    temb_bias = _silu(temb) @ p["dense0_w_t"] + p["dense0_b"]        # (N, out_ch)
    h = adagn_fn(h, zemb, p["gn1_w_t"], p["gn1_b"], g1, bias=temb_bias, apply_silu=True)
    # TODO(synk): Dropout_0 is eval-mode identity here (train-mode dropout not implemented).
    h = _conv3d(h, p["conv1_w"], p["conv1_b"], [(1, 1)] * 3)
    if in_ch != out_ch:
        x = _conv3d(x, p["conv2_w"], p["conv2_b"], [(0, 0)] * 3)
    return (x + h) / jnp.sqrt(2.0)   # skip_rescale=True


if __name__ == "__main__":
    # Small shapes consistent with the module: 3D feature maps (N, C, D, H, W).
    N = 2
    in_ch, out_ch = 8, 16
    D, H, W = 4, 16, 16              # H*W = 256 (lane dense), Cg*D multiple of 8
    zemb_dim = 32
    temb_dim = 16

    key = jax.random.PRNGKey(0)
    ks = jax.random.split(key, 10)

    x = jax.random.normal(ks[0], (N, in_ch, D, H, W), dtype=jnp.float32)
    zemb = jax.random.normal(ks[1], (N, zemb_dim), dtype=jnp.float32)
    temb = jax.random.normal(ks[2], (N, temb_dim), dtype=jnp.float32)

    def gn_params(k, c):
        # nn.Linear(zemb_dim, 2*c): weight (2c, zemb_dim); bias = [1]*c ++ [0]*c.
        w = 0.1 * jax.random.normal(k, (2 * c, zemb_dim), dtype=jnp.float32)
        b = jnp.concatenate([jnp.ones((c,), jnp.float32), jnp.zeros((c,), jnp.float32)])
        return w.T, b                                  # pre-transposed weight

    gn0_w_t, gn0_b = gn_params(ks[3], in_ch)
    gn1_w_t, gn1_b = gn_params(ks[4], out_ch)

    params = dict(
        gn0_w_t=gn0_w_t, gn0_b=gn0_b,
        gn1_w_t=gn1_w_t, gn1_b=gn1_b,
        conv0_w=0.05 * jax.random.normal(ks[5], (out_ch, in_ch, 3, 3, 3), jnp.float32),
        conv0_b=jnp.zeros((out_ch,), jnp.float32),
        conv1_w=0.05 * jax.random.normal(ks[6], (out_ch, out_ch, 3, 3, 3), jnp.float32),
        conv1_b=jnp.zeros((out_ch,), jnp.float32),
        conv2_w=0.05 * jax.random.normal(ks[7], (out_ch, in_ch, 1, 1, 1), jnp.float32),
        conv2_b=jnp.zeros((out_ch,), jnp.float32),
        dense0_w_t=0.05 * jax.random.normal(ks[8], (temb_dim, out_ch), jnp.float32),
        dense0_b=jnp.zeros((out_ch,), jnp.float32),
    )
    g0 = min(in_ch // 4, 32)

    # 1) plain AdaGN (single-pass fused path) vs pure-JAX reference.
    agn = jax.block_until_ready(adaptive_group_norm(x, zemb, gn0_w_t, gn0_b, g0))
    agn_ref = reference_adagn(x, zemb, gn0_w_t, gn0_b, g0)
    assert agn.shape == x.shape
    assert jnp.allclose(agn, agn_ref, atol=1e-4, rtol=1e-4), "AdaGN mismatch vs reference"

    # 2) AdaGN with fused per-channel bias + fused SiLU epilogue.
    cbias = 0.3 * jax.random.normal(ks[9], (N, in_ch), dtype=jnp.float32)
    fused = jax.block_until_ready(adaptive_group_norm(
        x, zemb, gn0_w_t, gn0_b, g0, bias=cbias, apply_silu=True))
    fused_ref = reference_adagn(x, zemb, gn0_w_t, gn0_b, g0, bias=cbias, apply_silu=True)
    assert jnp.allclose(fused, fused_ref, atol=1e-4, rtol=1e-4), "fused AdaGN mismatch"

    # 3) forced S-chunked two-pass path (the large-tile / v7x code path).
    chunked = jax.block_until_ready(adaptive_group_norm(
        x, zemb, gn0_w_t, gn0_b, g0, bias=cbias, apply_silu=True, force_chunk_cols=128))
    assert jnp.allclose(chunked, fused_ref, atol=1e-4, rtol=1e-4), "chunked AdaGN mismatch"

    # 4) full ResnetBlockBigGANpp_Adagn forward with the Pallas AdaGN inside.
    out = jax.block_until_ready(
        resnet_block_adagn_forward(params, x, temb, zemb, adaptive_group_norm))
    ref = resnet_block_adagn_forward(params, x, temb, zemb, reference_adagn)
    assert out.shape == (N, out_ch, D, H, W)
    assert jnp.allclose(out, ref, atol=1e-3, rtol=1e-3), "block mismatch vs reference"

    print("KERNEL_OK")
</pallas_src>

<mosaic_0001>
module attributes {stable_mosaic.version = 11 : i64} {
  func.func @kernel(%arg0: i32, %arg1: i32, %arg2: memref<1x2x16x256xf32, #tpu.memory_space<vmem>>, %arg3: memref<1x2x16x1xf32, #tpu.memory_space<vmem>>, %arg4: memref<1x2x16x1xf32, #tpu.memory_space<vmem>>, %arg5: memref<1x2x16x256xf32, #tpu.memory_space<vmem>>) attributes {dimension_semantics = [#tpu.dimension_semantics<parallel>, #tpu.dimension_semantics<parallel>], iteration_bounds = array<i64: 2, 1>, scalar_prefetch = 0 : i64, scratch_operands = 0 : i64, tpu.core_type = #tpu.core_type<tc>, window_params = [{transform_indices = @transform_0, window_bounds = array<i64: 1, 2, 16, 256>}, {transform_indices = @transform_1, window_bounds = array<i64: 1, 2, 16, 1>}, {transform_indices = @transform_2, window_bounds = array<i64: 1, 2, 16, 1>}, {transform_indices = @transform_3, window_bounds = array<i64: 1, 2, 16, 256>}]} {
    %c0 = arith.constant 0 : index
    %c0_0 = arith.constant 0 : index
    %c0_1 = arith.constant 0 : index
    %c0_2 = arith.constant 0 : index
    %0 = vector.load %arg2[%c0, %c0_0, %c0_1, %c0_2] : memref<1x2x16x256xf32, #tpu.memory_space<vmem>>, vector<1x2x16x256xf32>
    %cst = arith.constant dense<0.000000e+00> : vector<1x2x16xf32>
    %1 = vector.multi_reduction <add>, %0, %cst [3] : vector<1x2x16x256xf32> to vector<1x2x16xf32>
    %2 = vector.shape_cast %1 : vector<1x2x16xf32> to vector<1x2x16x1xf32>
    %cst_3 = arith.constant dense<0.000000e+00> : vector<1x2x1xf32>
    %3 = vector.multi_reduction <add>, %2, %cst_3 [2] : vector<1x2x16x1xf32> to vector<1x2x1xf32>
    %4 = vector.shape_cast %3 : vector<1x2x1xf32> to vector<1x2x1x1xf32>
    %5 = arith.mulf %0, %0 : vector<1x2x16x256xf32>
    %cst_4 = arith.constant dense<0.000000e+00> : vector<1x2x16xf32>
    %6 = vector.multi_reduction <add>, %5, %cst_4 [3] : vector<1x2x16x256xf32> to vector<1x2x16xf32>
    %7 = vector.shape_cast %6 : vector<1x2x16xf32> to vector<1x2x16x1xf32>
    %cst_5 = arith.constant dense<0.000000e+00> : vector<1x2x1xf32>
    %8 = vector.multi_reduction <add>, %7, %cst_5 [2] : vector<1x2x16x1xf32> to vector<1x2x1xf32>
    %9 = vector.shape_cast %8 : vector<1x2x1xf32> to vector<1x2x1x1xf32>
    %cst_6 = arith.constant 2.44140625E-4 : f32
    %10 = vector.broadcast %cst_6 : f32 to vector<1x2x1x1xf32>
    %11 = arith.mulf %4, %10 : vector<1x2x1x1xf32>
    %cst_7 = arith.constant 2.44140625E-4 : f32
    %12 = vector.broadcast %cst_7 : f32 to vector<1x2x1x1xf32>
    %13 = arith.mulf %9, %12 : vector<1x2x1x1xf32>
    %14 = arith.mulf %11, %11 : vector<1x2x1x1xf32>
    %15 = arith.subf %13, %14 : vector<1x2x1x1xf32>
    %cst_8 = arith.constant 0.000000e+00 : f32
    %16 = vector.broadcast %cst_8 : f32 to vector<1x2x1x1xf32>
    %17 = arith.maximumf %15, %16 : vector<1x2x1x1xf32>
    %cst_9 = arith.constant 9.99999997E-7 : f32
    %18 = vector.broadcast %cst_9 : f32 to vector<1x2x1x1xf32>
    %19 = arith.addf %17, %18 : vector<1x2x1x1xf32>
    %20 = math.rsqrt %19 : vector<1x2x1x1xf32>
    %c0_10 = arith.constant 0 : index
    %c0_11 = arith.constant 0 : index
    %c0_12 = arith.constant 0 : index
    %c0_13 = arith.constant 0 : index
    %21 = vector.load %arg3[%c0_10, %c0_11, %c0_12, %c0_13] : memref<1x2x16x1xf32, #tpu.memory_space<vmem>>, vector<1x2x16x1xf32>
    %22 = vector.broadcast %20 : vector<1x2x1x1xf32> to vector<1x2x16x1xf32>
    %23 = arith.mulf %21, %22 : vector<1x2x16x1xf32>
    %c0_14 = arith.constant 0 : index
    %c0_15 = arith.constant 0 : index
    %c0_16 = arith.constant 0 : index
    %c0_17 = arith.constant 0 : index
    %24 = vector.load %arg4[%c0_14, %c0_15, %c0_16, %c0_17] : memref<1x2x16x1xf32, #tpu.memory_space<vmem>>, vector<1x2x16x1xf32>
    %25 = vector.broadcast %11 : vector<1x2x1x1xf32> to vector<1x2x16x1xf32>
    %26 = arith.mulf %25, %23 : vector<1x2x16x1xf32>
    %27 = arith.subf %24, %26 : vector<1x2x16x1xf32>
    %28 = vector.broadcast %23 : vector<1x2x16x1xf32> to vector<1x2x16x256xf32>
    %29 = arith.mulf %0, %28 : vector<1x2x16x256xf32>
    %30 = vector.broadcast %27 : vector<1x2x16x1xf32> to vector<1x2x16x256xf32>
    %31 = arith.addf %29, %30 : vector<1x2x16x256xf32>
    %c0_18 = arith.constant 0 : index
    %c0_19 = arith.constant 0 : index
    %c0_20 = arith.constant 0 : index
    %c0_21 = arith.constant 0 : index
    %32 = vector.load %arg5[%c0_18, %c0_19, %c0_20, %c0_21] : memref<1x2x16x256xf32, #tpu.memory_space<vmem>>, vector<1x2x16x256xf32>
    tpu.vector_store %arg5[%c0_18, %c0_19, %c0_20, %c0_21], %31 {strides = array<i32>} : memref<1x2x16x256xf32, #tpu.memory_space<vmem>>, vector<1x2x16x256xf32>,
    return
  }
  func.func @transform_0(%arg0: i32, %arg1: i32) -> (i32, i32, i32, i32) {
    %c0_i32 = arith.constant 0 : i32
    %c0_i32_0 = arith.constant 0 : i32
    %c0_i32_1 = arith.constant 0 : i32
    return %arg0, %arg1, %c0_i32, %c0_i32_0 : i32, i32, i32, i32
  }
  func.func @transform_1(%arg0: i32, %arg1: i32) -> (i32, i32, i32, i32) {
    %c0_i32 = arith.constant 0 : i32
    %c0_i32_0 = arith.constant 0 : i32
    %c0_i32_1 = arith.constant 0 : i32
    return %arg0, %arg1, %c0_i32, %c0_i32_0 : i32, i32, i32, i32
  }
  func.func @transform_2(%arg0: i32, %arg1: i32) -> (i32, i32, i32, i32) {
    %c0_i32 = arith.constant 0 : i32
    %c0_i32_0 = arith.constant 0 : i32
    %c0_i32_1 = arith.constant 0 : i32
    return %arg0, %arg1, %c0_i32, %c0_i32_0 : i32, i32, i32, i32
  }
  func.func @transform_3(%arg0: i32, %arg1: i32) -> (i32, i32, i32, i32) {
    %c0_i32 = arith.constant 0 : i32
    %c0_i32_0 = arith.constant 0 : i32
    %c0_i32_1 = arith.constant 0 : i32
    return %arg0, %arg1, %c0_i32, %c0_i32_0 : i32, i32, i32, i32
  }
}

</mosaic_0001>

<llo_original>
// kernel: tpu_custom_call.1
$region0: #{tpu_custom_call.1}
  #allocation0 [shape = 'u32[]', space=smem, size = 0x4, offset = 0x4, fixed_abs, tag = 'smem constant byte address 0x4 - core index']
  #allocation1 [shape = 'u32[72,128]{1,0:T(1,128)}', space=vmem, size = 0x9000, scoped, tag = 'internal scratch']
  %s0 = inlined_call_operand.vmem [shape: f32[2,2,16,256], index: 0, kind: input, shape index: {}]
  %s1 = inlined_call_operand.vmem [shape: f32[2,2,16,1], index: 1, kind: input, shape index: {}]
  %s2 = inlined_call_operand.vmem [shape: f32[2,2,16,1], index: 2, kind: input, shape index: {}]
  %s3 = inlined_call_operand.hbm [shape: f32[2,2,16,256], index: 3, kind: output, shape index: {}]
  %s4 = sld [smem:[#allocation0]]
  $region45: #{tpu_custom_call.1} parent=0
    _
  %s6 = ssub.s32 1, %s4
  %s7 = scalar_select 0, %s6, %s4
  $region1: #{tpu_custom_call.1} parent=0
    #allocation2 [shape = 'u8[65536]{0}', space=vmem, size = 0x10000, scoped, tag = 'output window, operand 0']
    #allocation3 [shape = 's32[2]{0}', space=sflag, size = 0x8, scoped, tag = 'scoped memory for tpu_custom_call.1']
    %8 = vsyncpa [#allocation3], 0
    %s9 = scalar_lea.sflag [#allocation3], 1
    %10 = vsyncpa %s9, 0
    loop: start=0, step=1, limit=4
    $region2: #{tpu_custom_call.1} parent=1 // loop_pre_header
      _
    $region3: #{tpu_custom_call.1} parent=1 // loop_header
      %s12 = sphi 0, %s16
      %p13 = scmp.ge.s32.totalorder %s12, 4
      %s19 = sphi 0, %s31
      %s20 = sphi 0, %s27
      %s21 = sphi 0, %s19
      %s22 = sphi 0, %s20
      %s23 = sphi 0, %s21
      %s24 = sphi 0, %s22
      %s36 = sphi 0, %s38
      %s39 = sphi 0, %s36
      %s40 = sphi 0, %s39
      %s56 = sphi 0, %s40
      %s64 = sphi 0, %s66
      %s67 = sphi 0, %s64
      %s68 = sphi 0, %s67
      %s84 = sphi 0, %s68
      %s92 = sphi 0, %s94
      %s95 = sphi 0, %s92
      %s96 = sphi 0, %s95
      %s112 = sphi 0, %s96
      %s120 = sphi 0, %s122
      %s123 = sphi 0, %s120
      %s124 = sphi 0, %s123
      %s140 = sphi 0, %s124
    $region4: #{tpu_custom_call.1} parent=1 // loop_header_branch
      %15 = sbr.rel (%p13) target = $region8
    $region5: #{tpu_custom_call.1} parent=1 // loop_body
      %s17 = ssub.s32 %s12, 1
      %s18 = ssub.s32 %s12, 2
      %s25 = sadd.s32 1, %s20
      %p26 = scmp.ge.s32.totalorder %s25, 1
      %s27 = scalar_select %p26, 0, %s25
      %s28 = sadd.s32 1, %s19
      %s29 = scalar_select %p26, %s28, %s19
      %p30 = scmp.ge.s32.totalorder %s29, 2
      %s31 = scalar_select %p30, 0, %s29
      %s32 = ssub.s32 %s19, %s31
      %s33 = ssub.s32 %s20, %s27
      %s34 = sor.u32 %s32, %s33
      %p35 = scmp.eq.s32.totalorder %s34, 0
      %s37 = sadd.s32 %s36, 1
      %s38 = scalar_select %p35, %s36, %s37
      %p41 = pneg %p35
      %p42 = scmp.eq.s32.totalorder %s12, 1
      %p43 = por %p41, %p42
      %p44 = scmp.ne.s32.totalorder %s36, %s39
      %p45 = scmp.eq.s32.totalorder %s12, 0
      %p46 = por %p44, %p45
      %p47 = scmp.ne.s32.totalorder %s36, %s39
      %p48 = scmp.eq.s32.totalorder %s17, 1
      %p49 = por %p47, %p48
      %p50 = scmp.ne.s32.totalorder %s39, %s40
      %p51 = scmp.eq.s32.totalorder %s17, 0
      %p52 = por %p50, %p51
      %p53 = scmp.ne.s32.totalorder %s39, %s40
      %p54 = scmp.eq.s32.totalorder %s18, 1
      %p55 = por %p53, %p54
      %p57 = scmp.ne.s32.totalorder %s40, %s56
      %p58 = scmp.eq.s32.totalorder %s18, 0
      %p59 = por %p57, %p58
      %s60 = ssub.s32 %s19, %s31
      %s61 = ssub.s32 %s20, %s27
      %s62 = sor.u32 %s60, %s61
      %p63 = scmp.eq.s32.totalorder %s62, 0
      %s65 = sadd.s32 %s64, 1
      %s66 = scalar_select %p63, %s64, %s65
      %p69 = pneg %p63
      %p70 = scmp.eq.s32.totalorder %s12, 1
      %p71 = por %p69, %p70
      %p72 = scmp.ne.s32.totalorder %s64, %s67
      %p73 = scmp.eq.s32.totalorder %s12, 0
      %p74 = por %p72, %p73
      %p75 = scmp.ne.s32.totalorder %s64, %s67
      %p76 = scmp.eq.s32.totalorder %s17, 1
      %p77 = por %p75, %p76
      %p78 = scmp.ne.s32.totalorder %s67, %s68
      %p79 = scmp.eq.s32.totalorder %s17, 0
      %p80 = por %p78, %p79
      %p81 = scmp.ne.s32.totalorder %s67, %s68
      %p82 = scmp.eq.s32.totalorder %s18, 1
      %p83 = por %p81, %p82
      %p85 = scmp.ne.s32.totalorder %s68, %s84
      %p86 = scmp.eq.s32.totalorder %s18, 0
      %p87 = por %p85, %p86
      %s88 = ssub.s32 %s19, %s31
      %s89 = ssub.s32 %s20, %s27
      %s90 = sor.u32 %s88, %s89
      %p91 = scmp.eq.s32.totalorder %s90, 0
      %s93 = sadd.s32 %s92, 1
      %s94 = scalar_select %p91, %s92, %s93
      %p97 = pneg %p91
      %p98 = scmp.eq.s32.totalorder %s12, 1
      %p99 = por %p97, %p98
      %p100 = scmp.ne.s32.totalorder %s92, %s95
      %p101 = scmp.eq.s32.totalorder %s12, 0
      %p102 = por %p100, %p101
      %p103 = scmp.ne.s32.totalorder %s92, %s95
      %p104 = scmp.eq.s32.totalorder %s17, 1
      %p105 = por %p103, %p104
      %p106 = scmp.ne.s32.totalorder %s95, %s96
      %p107 = scmp.eq.s32.totalorder %s17, 0
      %p108 = por %p106, %p107
      %p109 = scmp.ne.s32.totalorder %s95, %s96
      %p110 = scmp.eq.s32.totalorder %s18, 1
      %p111 = por %p109, %p110
      %p113 = scmp.ne.s32.totalorder %s96, %s112
      %p114 = scmp.eq.s32.totalorder %s18, 0
      %p115 = por %p113, %p114
      %s116 = ssub.s32 %s19, %s31
      %s117 = ssub.s32 %s20, %s27
      %s118 = sor.u32 %s116, %s117
      %p119 = scmp.eq.s32.totalorder %s118, 0
      %s121 = sadd.s32 %s120, 1
      %s122 = scalar_select %p119, %s120, %s121
      %p125 = pneg %p119
      %p126 = scmp.eq.s32.totalorder %s12, 1
      %p127 = por %p125, %p126
      %p128 = scmp.ne.s32.totalorder %s120, %s123
      %p129 = scmp.eq.s32.totalorder %s12, 0
      %p130 = por %p128, %p129
      %p131 = scmp.ne.s32.totalorder %s120, %s123
      %p132 = scmp.eq.s32.totalorder %s17, 1
      %p133 = por %p131, %p132
      %p134 = scmp.ne.s32.totalorder %s123, %s124
      %p135 = scmp.eq.s32.totalorder %s17, 0
      %p136 = por %p134, %p135
      %p137 = scmp.ne.s32.totalorder %s123, %s124
      %p138 = scmp.eq.s32.totalorder %s18, 1
      %p139 = por %p137, %p138
      %p141 = scmp.ne.s32.totalorder %s124, %s140
      %p142 = scmp.eq.s32.totalorder %s18, 0
      %p143 = por %p141, %p142
      %p144 = scmp.le.s32.totalorder 1, %s12
      %p145 = scmp.lt.s32.totalorder %s12, 3
      %p146 = pnand %p144, %p145
      %p147 = pneg %p146
      // Predicated region
      $region9: #{tpu_custom_call.1} parent=5 // pred_check
        _
      $region10: #{tpu_custom_call.1} parent=5 // pred_check_branch
        %149 = sbr.rel (%p146) target = $region12
      $region11: #{tpu_custom_call.1} parent=5 // pred_region
        %s150 = ssub.s32 %s12, 1
      $region12: #{tpu_custom_call.1} parent=5 // pred_fallthru
        _
      %p151 = scmp.lt.s32.totalorder %s12, 2
      // Predicated region
      $region13: #{tpu_custom_call.1} parent=5 // pred_check
        %p152 = pneg %p151
      $region14: #{tpu_custom_call.1} parent=5 // pred_check_branch
        %154 = sbr.rel (%p152) target = $region16
      $region15: #{tpu_custom_call.1} parent=5 // pred_region
        // Predicated region
        $region17: #{tpu_custom_call.1} parent=15 // pred_check
          %p155 = pneg %p46
        $region18: #{tpu_custom_call.1} parent=15 // pred_check_branch
          %157 = sbr.rel (%p155) target = $region20
        $region19: #{tpu_custom_call.1} parent=15 // pred_region
          %s158 = smul.u32 2, %s20
          %p159 = scmp.lt.s32.totalorder %s19, 1
          %s160 = scalar_select %p159, %s19, 1
          %p161 = scmp.lt.s32.totalorder %s158, 1
          %s162 = scalar_select %p161, %s158, 1
          %s163 = smul.addr %s162, 4
          %s164 = smul.addr %s160, 8
          %s165 = sadd.s32 %s163, %s164
          %s166 = smul.addr %s165, 8
          %s167 = scalar_lea.vmem %s0, %s166
          %s168 = smul.u32 2, %s20
        $region20: #{tpu_custom_call.1} parent=15 // pred_fallthru
          _
        // Predicated region
        $region21: #{tpu_custom_call.1} parent=15 // pred_check
          %p169 = pneg %p74
        $region22: #{tpu_custom_call.1} parent=15 // pred_check_branch
          %171 = sbr.rel (%p169) target = $region24
        $region23: #{tpu_custom_call.1} parent=15 // pred_region
          %s172 = smul.u32 2, %s20
          %p173 = scmp.lt.s32.totalorder %s19, 1
          %s174 = scalar_select %p173, %s19, 1
          %p175 = scmp.lt.s32.totalorder %s172, 1
          %s176 = scalar_select %p175, %s172, 1
          %s177 = smul.addr %s176, 2
          %s178 = smul.addr %s174, 4
          %s179 = sadd.s32 %s177, %s178
          %s180 = smul.addr %s179, 8
          %s181 = scalar_lea.vmem %s1, %s180
          %s182 = smul.u32 2, %s20
        $region24: #{tpu_custom_call.1} parent=15 // pred_fallthru
          _
        // Predicated region
        $region25: #{tpu_custom_call.1} parent=15 // pred_check
          %p183 = pneg %p102
        $region26: #{tpu_custom_call.1} parent=15 // pred_check_branch
          %185 = sbr.rel (%p183) target = $region28
        $region27: #{tpu_custom_call.1} parent=15 // pred_region
          %s186 = smul.u32 2, %s20
          %p187 = scmp.lt.s32.totalorder %s19, 1
          %s188 = scalar_select %p187, %s19, 1
          %p189 = scmp.lt.s32.totalorder %s186, 1
          %s190 = scalar_select %p189, %s186, 1
          %s191 = smul.addr %s190, 2
          %s192 = smul.addr %s188, 4
          %s193 = sadd.s32 %s191, %s192
          %s194 = smul.addr %s193, 8
          %s195 = scalar_lea.vmem %s2, %s194
          %s196 = smul.u32 2, %s20
        $region28: #{tpu_custom_call.1} parent=15 // pred_fallthru
          _
      $region16: #{tpu_custom_call.1} parent=5 // pred_fallthru
        _
      %p197 = scmp.le.s32.totalorder 1, %s12
      %p198 = scmp.lt.s32.totalorder %s12, 3
      %p199 = pnand %p197, %p198
      %p200 = pneg %p199
      // Predicated region
      $region29: #{tpu_custom_call.1} parent=5 // pred_check
        _
      $region30: #{tpu_custom_call.1} parent=5 // pred_check_branch
        %202 = sbr.rel (%p199) target = $region32
      $region31: #{tpu_custom_call.1} parent=5 // pred_region
        %s203 = ssub.s32 %s12, 1
        %s204 = smul.u32 2, %s22
        %p205 = scmp.lt.s32.totalorder %s21, 1
        %s206 = scalar_select %p205, %s21, 1
        %p207 = scmp.lt.s32.totalorder %s204, 1
        %s208 = scalar_select %p207, %s204, 1
        %s209 = smul.addr %s208, 4
        %s210 = smul.addr %s206, 8
        %s211 = sadd.s32 %s209, %s210
        %s212 = smul.addr %s211, 8
        %s213 = scalar_lea.vmem %s0, %s212
        %p214 = pneg %p52
        %p215 = pneg %p49
        %s216 = smul.u32 2, %s22
        %p217 = scmp.lt.s32.totalorder %s21, 1
        %s218 = scalar_select %p217, %s21, 1
        %p219 = scmp.lt.s32.totalorder %s216, 1
        %s220 = scalar_select %p219, %s216, 1
        %s221 = smul.addr %s220, 2
        %s222 = smul.addr %s218, 4
        %s223 = sadd.s32 %s221, %s222
        %s224 = smul.addr %s223, 8
        %s225 = scalar_lea.vmem %s1, %s224
        %p226 = pneg %p80
        %p227 = pneg %p77
        %s228 = smul.u32 2, %s22
        %p229 = scmp.lt.s32.totalorder %s21, 1
        %s230 = scalar_select %p229, %s21, 1
        %p231 = scmp.lt.s32.totalorder %s228, 1
        %s232 = scalar_select %p231, %s228, 1
        %s233 = smul.addr %s232, 2
        %s234 = smul.addr %s230, 4
        %s235 = sadd.s32 %s233, %s234
        %s236 = smul.addr %s235, 8
        %s237 = scalar_lea.vmem %s2, %s236
        %p238 = pneg %p108
        %p239 = pneg %p105
        %p240 = pneg %p136
        %p241 = pneg %p133
        %s242 = sand.u32 %s123, 1
        %s243 = scalar_lea.sflag [#allocation3], %s242
        %s244 = sand.u32 %s123, 1
        %s245 = smul.addr %s244, 64
        %s246 = scalar_lea.vmem [#allocation2], %s245
        %s247 = smul.u32 2, %s22
        %p248 = scmp.lt.s32.totalorder %s21, 1
        %s249 = scalar_select %p248, %s21, 1
        %p250 = scmp.lt.s32.totalorder %s247, 1
        %s251 = scalar_select %p250, %s247, 1
        %s252 = smul.addr %s251, 4
        %s253 = smul.addr %s249, 8
        %s254 = sadd.s32 %s252, %s253
        %s255 = smul.addr %s254, 8
        %s256 = scalar_lea.vmem %s0, %s255
        %s257 = smul.u32 2, %s22
        %s258 = smul.u32 2, %s22
        %p259 = scmp.lt.s32.totalorder %s21, 1
        %s260 = scalar_select %p259, %s21, 1
        %p261 = scmp.lt.s32.totalorder %s258, 1
        %s262 = scalar_select %p261, %s258, 1
        %s263 = smul.addr %s262, 2
        %s264 = smul.addr %s260, 4
        %s265 = sadd.s32 %s263, %s264
        %s266 = smul.addr %s265, 8
        %s267 = scalar_lea.vmem %s1, %s266
        %s268 = smul.u32 2, %s22
        %s269 = smul.u32 2, %s22
        %p270 = scmp.lt.s32.totalorder %s21, 1
        %s271 = scalar_select %p270, %s21, 1
        %p272 = scmp.lt.s32.totalorder %s269, 1
        %s273 = scalar_select %p272, %s269, 1
        %s274 = smul.addr %s273, 2
        %s275 = smul.addr %s271, 4
        %s276 = sadd.s32 %s274, %s275
        %s277 = smul.addr %s276, 8
        %s278 = scalar_lea.vmem %s2, %s277
        %s279 = smul.u32 2, %s22
        %s280 = smul.u32 2, %s22
        %v281 = vld [vmem:[%s256] sm:$0xff]
        %v282 = vld [vmem:[%s256 + $0x8] sm:$0xff]
        %v283 = vld [vmem:[%s256 + $0x10] sm:$0xff]
        %v284 = vld [vmem:[%s256 + $0x18] sm:$0xff]
        %v285 = vld [vmem:[%s256 + $0x20] sm:$0xff]
        %v286 = vld [vmem:[%s256 + $0x28] sm:$0xff]
        %v287 = vld [vmem:[%s256 + $0x30] sm:$0xff]
        %v288 = vld [vmem:[%s256 + $0x38] sm:$0xff]
        %v289 = vadd.f32 %v281, %v282
        %290 = vadd.xlane.f32.xlu0 %v289
        %v291 = vpop.xlane.xlu0 %290
        %v292 = vadd.f32 %v283, %v284
        %293 = vadd.xlane.f32.xlu0 %v292
        %v294 = vpop.xlane.xlu0 %293
        %v295 = vadd.f32 %v285, %v286
        %296 = vadd.xlane.f32.xlu0 %v295
        %v297 = vpop.xlane.xlu0 %296
        %v298 = vadd.f32 %v287, %v288
        %299 = vadd.xlane.f32.xlu0 %v298
        %v300 = vpop.xlane.xlu0 %299
        %v301 = vadd.f32 %v291, %v294
        %v302 = vrot.slane %v301, 4
        %v303 = vadd.f32 %v301, %v302
        %v304 = vrot.slane %v303, 2
        %v305 = vadd.f32 %v303, %v304
        %v306 = vrot.slane %v305, 1
        %v307 = vadd.f32 %v305, %v306
        %v308 = vadd.f32 %v297, %v300
        %v309 = vrot.slane %v308, 4
        %v310 = vadd.f32 %v308, %v309
        %v311 = vrot.slane %v310, 2
        %v312 = vadd.f32 %v310, %v311
        %v313 = vrot.slane %v312, 1
        %v314 = vadd.f32 %v312, %v313
        %v315 = vmul.f32 %v281, %v281
        %v316 = vmul.f32 %v282, %v282
        %v317 = vmul.f32 %v283, %v283
        %v318 = vmul.f32 %v284, %v284
        %v319 = vmul.f32 %v285, %v285
        %v320 = vmul.f32 %v286, %v286
        %v321 = vmul.f32 %v287, %v287
        %v322 = vmul.f32 %v288, %v288
        %v323 = vadd.f32 %v315, %v316
        %324 = vadd.xlane.f32.xlu0 %v323
        %v325 = vpop.xlane.xlu0 %324
        %v326 = vadd.f32 %v317, %v318
        %327 = vadd.xlane.f32.xlu0 %v326
        %v328 = vpop.xlane.xlu0 %327
        %v329 = vadd.f32 %v319, %v320
        %330 = vadd.xlane.f32.xlu0 %v329
        %v331 = vpop.xlane.xlu0 %330
        %v332 = vadd.f32 %v321, %v322
        %333 = vadd.xlane.f32.xlu0 %v332
        %v334 = vpop.xlane.xlu0 %333
        %v335 = vadd.f32 %v325, %v328
        %v336 = vrot.slane %v335, 4
        %v337 = vadd.f32 %v335, %v336
        %v338 = vrot.slane %v337, 2
        %v339 = vadd.f32 %v337, %v338
        %v340 = vrot.slane %v339, 1
        %v341 = vadd.f32 %v339, %v340
        %v342 = vadd.f32 %v331, %v334
        %v343 = vrot.slane %v342, 4
        %v344 = vadd.f32 %v342, %v343
        %v345 = vrot.slane %v344, 2
        %v346 = vadd.f32 %v344, %v345
        %v347 = vrot.slane %v346, 1
        %v348 = vadd.f32 %v346, %v347
        %v349 = vmul.f32 %v307, 0.00024414063
        %v350 = vmul.f32 %v314, 0.00024414063
        %v351 = vmul.f32 %v341, 0.00024414063
        %v352 = vmul.f32 %v348, 0.00024414063
        %v353 = vmul.f32 %v349, %v349
        %v354 = vmul.f32 %v350, %v350
        %v355 = vsub.f32 %v351, %v353
        %v356 = vsub.f32 %v352, %v354
        %v357 = vmax.f32 %v355, 0.0
        %v358 = vmax.f32 %v356, 0.0
        %v359 = vadd.f32 %v357, 1e-06
        %v360 = vadd.f32 %v358, 1e-06
        %v361 = vrsqrt.pop %v359
        %v362 = vmul.f32 %v361, %v359
        %v363 = vmul.f32 %v362, %v361
        %v364 = vmul.f32 0.5, %v363
        %v365 = vsub.f32 1.5, %v364
        %v366 = vmul.f32 %v361, %v365
        %vm367 = vweird.f32 %v359
        %vm368 = vweird.f32 %v361
        %vm369 = vmor %vm367, %vm368
        %v370 = vsel %vm369, %v361, %v366
        %v371 = vrsqrt.pop %v360
        %v372 = vmul.f32 %v371, %v360
        %v373 = vmul.f32 %v372, %v371
        %v374 = vmul.f32 0.5, %v373
        %v375 = vsub.f32 1.5, %v374
        %v376 = vmul.f32 %v371, %v375
        %vm377 = vweird.f32 %v360
        %vm378 = vweird.f32 %v371
        %vm379 = vmor %vm377, %vm378
        %v380 = vsel %vm379, %v371, %v376
        %v381 = vld [vmem:[%s267] sm:$0xff]
        %v382 = vld [vmem:[%s267 + $0x8] sm:$0xff]
        %v383 = vld [vmem:[%s267 + $0x10] sm:$0xff]
        %v384 = vld [vmem:[%s267 + $0x18] sm:$0xff]
        %v385 = vmul.f32 %v381, %v370
        %v386 = vmul.f32 %v382, %v370
        %v387 = vmul.f32 %v383, %v380
        %v388 = vmul.f32 %v384, %v380
        %v389 = vld [vmem:[%s278] sm:$0xff]
        %v390 = vld [vmem:[%s278 + $0x8] sm:$0xff]
        %v391 = vld [vmem:[%s278 + $0x10] sm:$0xff]
        %v392 = vld [vmem:[%s278 + $0x18] sm:$0xff]
        %v393 = vmul.f32 %v349, %v385
        %v394 = vmul.f32 %v349, %v386
        %v395 = vmul.f32 %v350, %v387
        %v396 = vmul.f32 %v350, %v388
        %v397 = vsub.f32 %v389, %v393
        %v398 = vsub.f32 %v390, %v394
        %v399 = vsub.f32 %v391, %v395
        %v400 = vsub.f32 %v392, %v396
        %402 = vset.pattern.permute.xlu0 0
        %403 = vperm.xlu0 %402, %v385
        %v404 = vpop.permute.xlu0 %403
        %407 = vset.pattern.permute.xlu0 0
        %408 = vperm.xlu0 %407, %v386
        %v409 = vpop.permute.xlu0 %408
        %412 = vset.pattern.permute.xlu0 0
        %413 = vperm.xlu0 %412, %v387
        %v414 = vpop.permute.xlu0 %413
        %417 = vset.pattern.permute.xlu0 0
        %418 = vperm.xlu0 %417, %v388
        %v419 = vpop.permute.xlu0 %418
        %v421 = vmul.f32 %v281, %v404
        %v422 = vmul.f32 %v282, %v404
        %v423 = vmul.f32 %v283, %v409
        %v424 = vmul.f32 %v284, %v409
        %v425 = vmul.f32 %v285, %v414
        %v426 = vmul.f32 %v286, %v414
        %v427 = vmul.f32 %v287, %v419
        %v428 = vmul.f32 %v288, %v419
        %430 = vset.pattern.permute.xlu0 0
        %431 = vperm.xlu0 %430, %v397
        %v432 = vpop.permute.xlu0 %431
        %435 = vset.pattern.permute.xlu0 0
        %436 = vperm.xlu0 %435, %v398
        %v437 = vpop.permute.xlu0 %436
        %440 = vset.pattern.permute.xlu0 0
        %441 = vperm.xlu0 %440, %v399
        %v442 = vpop.permute.xlu0 %441
        %445 = vset.pattern.permute.xlu0 0
        %446 = vperm.xlu0 %445, %v400
        %v447 = vpop.permute.xlu0 %446
        %v449 = vadd.f32 %v421, %v432
        %v450 = vadd.f32 %v422, %v432
        %v451 = vadd.f32 %v423, %v437
        %v452 = vadd.f32 %v424, %v437
        %v453 = vadd.f32 %v425, %v442
        %v454 = vadd.f32 %v426, %v442
        %v455 = vadd.f32 %v427, %v447
        %v456 = vadd.f32 %v428, %v447
        %457 = vst [vmem:[%s246] sm:$0xff] %v449
        %458 = vst [vmem:[%s246 + $0x8] sm:$0xff] %v450
        %459 = vst [vmem:[%s246 + $0x10] sm:$0xff] %v451
        %460 = vst [vmem:[%s246 + $0x18] sm:$0xff] %v452
        %461 = vst [vmem:[%s246 + $0x20] sm:$0xff] %v453
        %462 = vst [vmem:[%s246 + $0x28] sm:$0xff] %v454
        %463 = vst [vmem:[%s246 + $0x30] sm:$0xff] %v455
        %464 = vst [vmem:[%s246 + $0x38] sm:$0xff] %v456
        %s465 = sand.u32 %s123, 1
        %s466 = scalar_lea.sflag [#allocation3], %s465
        %s467 = sand.u32 %s123, 1
        %s468 = smul.addr %s467, 64
        %s469 = scalar_lea.vmem [#allocation2], %s468
        // Predicated region
        $region33: #{tpu_custom_call.1} parent=31 // pred_check
          %p470 = pneg %p133
        $region34: #{tpu_custom_call.1} parent=31 // pred_check_branch
          %472 = sbr.rel (%p470) target = $region36
        $region35: #{tpu_custom_call.1} parent=31 // pred_region
          %s473 = smul.u32 2, %s22
          %475 = vsyncadd %s466, 0
          %s476 = smul.addr %s473, 4
          %s477 = smul.addr %s21, 8
          %s478 = sadd.s32 %s476, %s477
          %s479 = smul.addr %s478, 8
          %s480 = scalar_lea.hbm %s3, %s479
          %s481 = sshll.u32 %s469, 4
          %s482 = int_to_ptr.vmem [resolvable:$true] %s481
          %s483 = sshll.u32 %s480, 4
          %s484 = int_to_ptr.hbm [resolvable:$true] %s483
          %489 = dma.vmem_to_hbm [thread:$0]  %s482, 1024, %s484, %s466, 256, 256, 16
        $region36: #{tpu_custom_call.1} parent=31 // pred_fallthru
          _
      $region32: #{tpu_custom_call.1} parent=5 // pred_fallthru
        _
      %p490 = scmp.le.s32.totalorder 2, %s12
      // Predicated region
      $region37: #{tpu_custom_call.1} parent=5 // pred_check
        %p491 = pneg %p490
      $region38: #{tpu_custom_call.1} parent=5 // pred_check_branch
        %493 = sbr.rel (%p491) target = $region40
      $region39: #{tpu_custom_call.1} parent=5 // pred_region
        %s494 = ssub.s32 %s12, 2
        // Predicated region
        $region41: #{tpu_custom_call.1} parent=39 // pred_check
          %p495 = pneg %p139
        $region42: #{tpu_custom_call.1} parent=39 // pred_check_branch
          %497 = sbr.rel (%p495) target = $region44
        $region43: #{tpu_custom_call.1} parent=39 // pred_region
          %s498 = sand.u32 %s124, 1
          %s499 = scalar_lea.sflag [#allocation3], %s498
          %s500 = sand.u32 %s124, 1
          %s501 = smul.addr %s500, 64
          %s502 = scalar_lea.vmem [#allocation2], %s501
          %504 = dma.done %s499, 1024
        $region44: #{tpu_custom_call.1} parent=39 // pred_fallthru
          _
      $region40: #{tpu_custom_call.1} parent=5 // pred_fallthru
        _
    $region6: #{tpu_custom_call.1} parent=1 // loop_footer
      %s16 = sadd.s32 1, %s12
    $region7: #{tpu_custom_call.1} parent=1 // loop_footer_branch
      %11 = sbr.rel target = $region3
    $region8: #{tpu_custom_call.1} parent=1 // loop_exit
      _
    %505 = vsyncpa [#allocation3], 1
    %s506 = scalar_lea.sflag [#allocation3], 1
    %507 = vsyncpa %s506, 1

</llo_original>
